<compile_context>
chip_gen: v5e
topology: v5e:2x2
jax: 0.10.0
libtpu: 0.0.40
codegen_flags: <defaults>
</compile_context>

<pallas_src>
import functools
import math

import jax
import jax.numpy as jnp
from jax.experimental import pallas as pl
from jax.experimental.pallas import tpu as pltpu

LANES = 128
SUBLANES = 8
ROW_ALIGN = 32   # rows multiple of 32 satisfies sublane packing for every dtype


def _tpu_defaults():
    """(core_splits, per-input block bytes) chosen per TPU generation."""
    kind = ""
    try:
        kind = jax.devices()[0].device_kind.lower()
    except Exception:
        pass
    if "7" in kind:            # v7x: 2 TensorCores/chip, ~3.2 TB/s HBM per TC
        return 2, 4 << 20      # 4 MiB per input block, 2-way core split
    return 1, 2 << 20          # v5e / v6e: single TensorCore, 2 MiB blocks


def _sse_kernel(x_ref, y_ref, out_ref, acc_ref, *,
                blocks_per_core, tile_rows, valid_rows, needs_mask):
    c = pl.program_id(0)       # core-split axis ('parallel')
    i = pl.program_id(1)       # streaming/reduction axis ('arbitrary')

    @pl.when(i == 0)
    def _():
        acc_ref[...] = jnp.zeros_like(acc_ref)

    # Cast in-kernel (VPU work, hidden under the DMA); HBM keeps native dtype.
    d = x_ref[...].astype(jnp.float32) - y_ref[...].astype(jnp.float32)
    d2 = d * d

    groups = tile_rows // SUBLANES

    def accumulate(v):
        # (tile_rows,128) -> (groups,8,128) is aligned with the native (8,128)
        # f32 tiling, so the reshape is free and the leading-axis reduce is
        # pure VALU vreg adds into the tiny (8,128) accumulator.
        acc_ref[...] += v.reshape(groups, SUBLANES, LANES).sum(axis=0)

    if needs_mask:
        block_id = c * blocks_per_core + i
        block_end = (block_id + 1) * tile_rows

        @pl.when(block_end <= valid_rows)
        def _():
            accumulate(d2)

        @pl.when(block_end > valid_rows)
        def _():
            # Ragged last block / phantom blocks: the index_map clamps their
            # block index, so any duplicate/garbage rows are zeroed with a
            # select (NOT a multiply -> no NaN/Inf propagation).
            row = jax.lax.broadcasted_iota(jnp.int32, d2.shape, 0)
            global_row = block_id * tile_rows + row
            accumulate(jnp.where(global_row < valid_rows, d2, 0.0))
    else:
        accumulate(d2)

    @pl.when(i == pl.num_programs(1) - 1)
    def _():
        # Full unmasked (8,128) store; cross-lane reduce happens once outside
        # the kernel on core_splits*8*128 floats.
        out_ref[0, :, :] = acc_ref[...]


def psnr_pallas(x, y, eps=1e-6, *, block_bytes=None, core_splits=None):
    """PSNR between two same-shaped arrays (any layout, e.g. NCHW)."""
    assert x.shape == y.shape, "X and Y must have the same shape"
    n = x.size

    auto_cores, auto_bytes = _tpu_defaults()
    if core_splits is None:
        core_splits = auto_cores
    if block_bytes is None:
        block_bytes = auto_bytes

    # NOTE: ravel + reshape is free only for contiguous row-major inputs; a
    # transposed/strided caller array would make XLA materialize a copy (one
    # extra HBM pass).  Inputs from the reference module are contiguous.
    xf = jnp.ravel(x)
    yf = jnp.ravel(y)

    # Zero-pad (contributes nothing to the SSE) up to a whole number of
    # (8,128) tiles so the row count is always a multiple of 8.  At most 1023
    # elements; no pad at all for tile-aligned sizes.
    tile_elems = SUBLANES * LANES
    rem = n % tile_elems
    if rem:
        pad = tile_elems - rem
        xf = jnp.pad(xf, (0, pad))
        yf = jnp.pad(yf, (0, pad))

    rows = xf.size // LANES
    x2 = xf.reshape(rows, LANES)
    y2 = yf.reshape(rows, LANES)

    # Dtype-aware block sizing: ~block_bytes per input per grid step.
    itemsize = max(jnp.dtype(x.dtype).itemsize, jnp.dtype(y.dtype).itemsize)
    tile_rows = max(ROW_ALIGN,
                    (block_bytes // (LANES * itemsize)) // ROW_ALIGN * ROW_ALIGN)
    if rows <= tile_rows:
        tile_rows = rows   # full-array block: always a legal block shape

    total_blocks = pl.cdiv(rows, tile_rows)
    core_splits = max(1, min(core_splits, total_blocks))  # never duplicate work
    blocks_per_core = pl.cdiv(total_blocks, core_splits)
    needs_mask = (core_splits * blocks_per_core * tile_rows) != rows
    last_block = total_blocks - 1

    def in_index(c, i):
        # Clamp phantom/out-of-range block indices; the kernel masks their data.
        return (jnp.minimum(c * blocks_per_core + i, last_block), 0)

    kernel = functools.partial(
        _sse_kernel,
        blocks_per_core=blocks_per_core,
        tile_rows=tile_rows,
        valid_rows=rows,
        needs_mask=needs_mask,
    )

    # 2 inputs x 2 buffers x block + headroom; double-buffering is enough for
    # a streaming reduction, so VMEM is spent on block size, not buffer depth.
    block_in_bytes = tile_rows * LANES * itemsize
    vmem_limit = int(max(16 << 20, 2 * 2 * block_in_bytes + (4 << 20)))

    partials = pl.pallas_call(
        kernel,
        out_shape=jax.ShapeDtypeStruct((core_splits, SUBLANES, LANES), jnp.float32),
        grid_spec=pltpu.PrefetchScalarGridSpec(
            num_scalar_prefetch=0,
            grid=(core_splits, blocks_per_core),
            in_specs=[
                pl.BlockSpec((tile_rows, LANES), in_index),
                pl.BlockSpec((tile_rows, LANES), in_index),
            ],
            out_specs=pl.BlockSpec((1, SUBLANES, LANES), lambda c, i: (c, 0, 0)),
            scratch_shapes=[pltpu.VMEM((SUBLANES, LANES), jnp.float32)],
        ),
        compiler_params=pltpu.CompilerParams(
            dimension_semantics=("parallel", "arbitrary"),
            vmem_limit_bytes=vmem_limit,
        ),
    )(x2, y2)

    # Tiny trailing scalar math (matches the PyTorch module exactly).
    sse = jnp.sum(partials)
    mse = sse / jnp.float32(n)
    psnr = 10.0 * jnp.log10(1.0 / (mse + jnp.float32(eps)))
    return psnr


if __name__ == "__main__":
    key = jax.random.PRNGKey(0)
    kx, ky = jax.random.split(key)

    def ref_psnr(X, Y, eps=1e-6):
        mse = jnp.mean((X.astype(jnp.float32) - Y.astype(jnp.float32)) ** 2)
        return 10.0 * math.log10(1.0 / (float(mse) + eps))

    # 1) NCHW, small, tile-aligned (batch=2, channels=4, spatial=16).
    X = jax.random.uniform(kx, (2, 4, 16, 16), dtype=jnp.float32)
    Y = jnp.clip(X + 0.05 * jax.random.normal(ky, (2, 4, 16, 16)), 0.0, 1.0)
    p = jax.block_until_ready(psnr_pallas(X, Y))
    assert abs(float(p) - ref_psnr(X, Y)) < 1e-3, (float(p), ref_psnr(X, Y))

    # 2) Ragged element count -> exercises the zero-pad path.
    kx2, ky2 = jax.random.split(ky)
    X2 = jax.random.uniform(kx2, (3, 5, 7, 11), dtype=jnp.float32)
    Y2 = jnp.clip(X2 + 0.1 * jax.random.normal(ky2, (3, 5, 7, 11)), 0.0, 1.0)
    p2 = jax.block_until_ready(psnr_pallas(X2, Y2))
    assert abs(float(p2) - ref_psnr(X2, Y2)) < 1e-3, (float(p2), ref_psnr(X2, Y2))

    # 3) Forced small blocks + 2-way split -> exercises multi-block streaming,
    #    the ragged-last-block mask, and phantom-block clamping.
    kx3, ky3 = jax.random.split(ky2)
    X3 = jax.random.uniform(kx3, (1, 1, 160, 128), dtype=jnp.float32)
    Y3 = jnp.clip(X3 + 0.02 * jax.random.normal(ky3, (1, 1, 160, 128)), 0.0, 1.0)
    p3 = jax.block_until_ready(
        psnr_pallas(X3, Y3, block_bytes=64 << 10, core_splits=2))
    assert abs(float(p3) - ref_psnr(X3, Y3)) < 1e-3, (float(p3), ref_psnr(X3, Y3))

    print("KERNEL_OK")
</pallas_src>

<mosaic_0001>
module attributes {stable_mosaic.version = 11 : i64} {
  func.func @_sse_kernel(%arg0: i32, %arg1: i32, %arg2: memref<16x128xf32, #tpu.memory_space<vmem>>, %arg3: memref<16x128xf32, #tpu.memory_space<vmem>>, %arg4: memref<1x8x128xf32, #tpu.memory_space<vmem>>, %arg5: memref<8x128xf32, #tpu.memory_space<vmem>>) attributes {dimension_semantics = [#tpu.dimension_semantics<parallel>, #tpu.dimension_semantics<arbitrary>], iteration_bounds = array<i64: 1, 1>, scalar_prefetch = 0 : i64, scratch_operands = 1 : i64, tpu.core_type = #tpu.core_type<tc>, window_params = [{transform_indices = @transform_0, window_bounds = array<i64: 16, 128>}, {transform_indices = @transform_1, window_bounds = array<i64: 16, 128>}, {transform_indices = @transform_2, window_bounds = array<i64: 1, 8, 128>}]} {
    %c0_i32 = arith.constant 0 : i32
    %0 = arith.cmpi eq, %arg1, %c0_i32 : i32
    %1 = arith.extui %0 : i1 to i32
    %c0_i32_0 = arith.constant 0 : i32
    %2 = arith.cmpi ne, %1, %c0_i32_0 : i32
    scf.if %2 {
      %cst_10 = arith.constant 0.000000e+00 : f32
      %15 = vector.broadcast %cst_10 : f32 to vector<8x128xf32>
      %c0_11 = arith.constant 0 : index
      %c0_12 = arith.constant 0 : index
      %16 = vector.load %arg5[%c0_11, %c0_12] : memref<8x128xf32, #tpu.memory_space<vmem>>, vector<8x128xf32>
      tpu.vector_store %arg5[%c0_11, %c0_12], %15 {strides = array<i32>} : memref<8x128xf32, #tpu.memory_space<vmem>>, vector<8x128xf32>,
    } else {
    }
    %c0 = arith.constant 0 : index
    %c0_1 = arith.constant 0 : index
    %3 = vector.load %arg2[%c0, %c0_1] : memref<16x128xf32, #tpu.memory_space<vmem>>, vector<16x128xf32>
    %c0_2 = arith.constant 0 : index
    %c0_3 = arith.constant 0 : index
    %4 = vector.load %arg3[%c0_2, %c0_3] : memref<16x128xf32, #tpu.memory_space<vmem>>, vector<16x128xf32>
    %5 = arith.subf %3, %4 : vector<16x128xf32>
    %6 = arith.mulf %5, %5 : vector<16x128xf32>
    %c0_4 = arith.constant 0 : index
    %c0_5 = arith.constant 0 : index
    %7 = vector.load %arg5[%c0_4, %c0_5] : memref<8x128xf32, #tpu.memory_space<vmem>>, vector<8x128xf32>
    %8 = vector.shape_cast %6 : vector<16x128xf32> to vector<2x8x128xf32>
    %cst = arith.constant dense<0.000000e+00> : vector<8x128xf32>
    %9 = vector.multi_reduction <add>, %8, %cst [0] : vector<2x8x128xf32> to vector<8x128xf32>
    %10 = arith.addf %7, %9 : vector<8x128xf32>
    %c0_6 = arith.constant 0 : index
    %c0_7 = arith.constant 0 : index
    %11 = vector.load %arg5[%c0_6, %c0_7] : memref<8x128xf32, #tpu.memory_space<vmem>>, vector<8x128xf32>
    tpu.vector_store %arg5[%c0_6, %c0_7], %10 {strides = array<i32>} : memref<8x128xf32, #tpu.memory_space<vmem>>, vector<8x128xf32>,
    %c0_i32_8 = arith.constant 0 : i32
    %12 = arith.cmpi eq, %arg1, %c0_i32_8 : i32
    %13 = arith.extui %12 : i1 to i32
    %c0_i32_9 = arith.constant 0 : i32
    %14 = arith.cmpi ne, %13, %c0_i32_9 : i32
    scf.if %14 {
      %c0_10 = arith.constant 0 : index
      %c0_11 = arith.constant 0 : index
      %15 = vector.load %arg5[%c0_10, %c0_11] : memref<8x128xf32, #tpu.memory_space<vmem>>, vector<8x128xf32>
      %c0_12 = arith.constant 0 : index
      %c0_13 = arith.constant 0 : index
      %c0_14 = arith.constant 0 : index
      %16 = vector.load %arg4[%c0_12, %c0_13, %c0_14] : memref<1x8x128xf32, #tpu.memory_space<vmem>>, vector<1x8x128xf32>
      %17 = vector.shape_cast %16 : vector<1x8x128xf32> to vector<8x128xf32>
      %18 = vector.shape_cast %15 : vector<8x128xf32> to vector<1x8x128xf32>
      tpu.vector_store %arg4[%c0_12, %c0_13, %c0_14], %18 {strides = array<i32>} : memref<1x8x128xf32, #tpu.memory_space<vmem>>, vector<1x8x128xf32>,
    } else {
    }
    return
  }
  func.func @transform_0(%arg0: i32, %arg1: i32) -> (i32, i32) {
    %c1_i32 = arith.constant 1 : i32
    %0 = arith.muli %arg0, %c1_i32 : i32
    %1 = arith.addi %0, %arg1 : i32
    %c0_i32 = arith.constant 0 : i32
    %2 = arith.minsi %1, %c0_i32 : i32
    %c0_i32_0 = arith.constant 0 : i32
    %c0_i32_1 = arith.constant 0 : i32
    return %2, %c0_i32_0 : i32, i32
  }
  func.func @transform_1(%arg0: i32, %arg1: i32) -> (i32, i32) {
    %c1_i32 = arith.constant 1 : i32
    %0 = arith.muli %arg0, %c1_i32 : i32
    %1 = arith.addi %0, %arg1 : i32
    %c0_i32 = arith.constant 0 : i32
    %2 = arith.minsi %1, %c0_i32 : i32
    %c0_i32_0 = arith.constant 0 : i32
    %c0_i32_1 = arith.constant 0 : i32
    return %2, %c0_i32_0 : i32, i32
  }
  func.func @transform_2(%arg0: i32, %arg1: i32) -> (i32, i32, i32) {
    %c0_i32 = arith.constant 0 : i32
    %c0_i32_0 = arith.constant 0 : i32
    %c0_i32_1 = arith.constant 0 : i32
    return %arg0, %c0_i32, %c0_i32_0 : i32, i32, i32
  }
}

</mosaic_0001>

<llo_original>
// kernel: tpu_custom_call.1
$region0: #{tpu_custom_call.1}
  #allocation0 [shape = 'u32[]', space=smem, size = 0x4, offset = 0x4, fixed_abs, tag = 'smem constant byte address 0x4 - core index']
  #allocation1 [shape = 'u32[72,128]{1,0:T(1,128)}', space=vmem, size = 0x9000, scoped, tag = 'internal scratch']
  #allocation2 [shape = 'f32[8,128]{1,0:T(8,128)}', space=vmem, size = 0x1000, scoped, tag = 'scratch operand']
  %s0 = inlined_call_operand.hbm [shape: f32[16,128], index: 0, kind: input, shape index: {}]
  %s1 = inlined_call_operand.hbm [shape: f32[16,128], index: 1, kind: input, shape index: {}]
  %s2 = inlined_call_operand.hbm [shape: f32[1,8,128], index: 2, kind: output, shape index: {}]
  %s3 = sld [smem:[#allocation0]]
  $region34: #{tpu_custom_call.1} parent=0
    _
  %s5 = ssub.s32 1, %s3
  %s6 = scalar_select 0, %s5, %s3
  $region1: #{tpu_custom_call.1} parent=0
    #allocation3 [shape = 'u8[8192]{0}', space=vmem, size = 0x2000, scoped, tag = 'input window, operand 0, single buffered']
    #allocation4 [shape = 's32[1]{0}', space=sflag, size = 0x4, scoped, tag = 'scoped memory for tpu_custom_call.1']
    #allocation5 [shape = 's32[1]{0}', space=sflag, size = 0x4, scoped, tag = 'scoped memory for tpu_custom_call.1']
    #allocation6 [shape = 'u8[8192]{0}', space=vmem, size = 0x2000, scoped, tag = 'input window, operand 1, single buffered']
    #allocation7 [shape = 's32[1]{0}', space=sflag, size = 0x4, scoped, tag = 'scoped memory for tpu_custom_call.1']
    #allocation8 [shape = 'u8[4096]{0}', space=vmem, size = 0x1000, scoped, tag = 'output window, operand 0, single buffered']
    %7 = vsyncpa [#allocation4], 0
    %8 = vsyncpa [#allocation7], 0
    %9 = vsyncpa [#allocation5], 0
    // Predicated region
    $region2: #{tpu_custom_call.1} parent=1 // pred_check
      _
    $region3: #{tpu_custom_call.1} parent=1 // pred_check_branch
      %11 = sbr.rel (0) target = $region5
    $region4: #{tpu_custom_call.1} parent=1 // pred_region
      %s12 = sadd.s32 0, 0
      %p13 = scmp.lt.s32.totalorder %s12, 0
      %s14 = scalar_select %p13, %s12, 0
      %s15 = smul.u32 2, %s14
      %17 = vsyncadd [#allocation4], 0
      %s18 = smul.addr %s15, 8
      %s19 = scalar_lea.hbm %s0, %s18
      %s20 = sshll.u32 %s19, 4
      %s21 = int_to_ptr.hbm [resolvable:$true] %s20
      %s22 = sshll.u32 [#allocation3], 4
      %s23 = int_to_ptr.vmem [resolvable:$true] %s22
      %28 = dma.hbm_to_vmem [thread:$0]  %s21, 256, %s23, [#allocation4], 128, 128, 8
    $region5: #{tpu_custom_call.1} parent=1 // pred_fallthru
      _
    // Predicated region
    $region6: #{tpu_custom_call.1} parent=1 // pred_check
      _
    $region7: #{tpu_custom_call.1} parent=1 // pred_check_branch
      %30 = sbr.rel (0) target = $region9
    $region8: #{tpu_custom_call.1} parent=1 // pred_region
      %s31 = sadd.s32 0, 0
      %p32 = scmp.lt.s32.totalorder %s31, 0
      %s33 = scalar_select %p32, %s31, 0
      %s34 = smul.u32 2, %s33
      %36 = vsyncadd [#allocation7], 0
      %s37 = smul.addr %s34, 8
      %s38 = scalar_lea.hbm %s1, %s37
      %s39 = sshll.u32 %s38, 4
      %s40 = int_to_ptr.hbm [resolvable:$true] %s39
      %s41 = sshll.u32 [#allocation6], 4
      %s42 = int_to_ptr.vmem [resolvable:$true] %s41
      %47 = dma.hbm_to_vmem [thread:$0]  %s40, 256, %s42, [#allocation7], 128, 128, 8
    $region9: #{tpu_custom_call.1} parent=1 // pred_fallthru
      _
    // Predicated region
    $region10: #{tpu_custom_call.1} parent=1 // pred_check
      _
    $region11: #{tpu_custom_call.1} parent=1 // pred_check_branch
      %49 = sbr.rel (0) target = $region13
    $region12: #{tpu_custom_call.1} parent=1 // pred_region
      %51 = dma.done [#allocation4], 256
    $region13: #{tpu_custom_call.1} parent=1 // pred_fallthru
      _
    // Predicated region
    $region14: #{tpu_custom_call.1} parent=1 // pred_check
      _
    $region15: #{tpu_custom_call.1} parent=1 // pred_check_branch
      %53 = sbr.rel (0) target = $region17
    $region16: #{tpu_custom_call.1} parent=1 // pred_region
      %55 = dma.done [#allocation7], 256
    $region17: #{tpu_custom_call.1} parent=1 // pred_fallthru
      _
    %s56 = sadd.s32 0, 0
    %p57 = scmp.lt.s32.totalorder %s56, 0
    %s58 = scalar_select %p57, %s56, 0
    %s59 = smul.u32 2, %s58
    %s60 = sadd.s32 0, 0
    %p61 = scmp.lt.s32.totalorder %s60, 0
    %s62 = scalar_select %p61, %s60, 0
    %s63 = smul.u32 2, %s62
    %p64 = scmp.eq.s32.totalorder 0, 0
    // Predicated region
    $region18: #{tpu_custom_call.1} parent=1 // pred_check
      %p65 = pneg %p64
    $region19: #{tpu_custom_call.1} parent=1 // pred_check_branch
      %67 = sbr.rel (%p65) target = $region21
    $region20: #{tpu_custom_call.1} parent=1 // pred_region
      %68 = vst [vmem:[#allocation2] sm:$0xff] 0.0
    $region21: #{tpu_custom_call.1} parent=1 // pred_fallthru
      _
    %v69 = vld [vmem:[#allocation3] sm:$0xff]
    %v70 = vld [vmem:[#allocation3 + $0x8] sm:$0xff]
    %v71 = vld [vmem:[#allocation6] sm:$0xff]
    %v72 = vld [vmem:[#allocation6 + $0x8] sm:$0xff]
    %v73 = vsub.f32 %v69, %v71
    %v74 = vsub.f32 %v70, %v72
    %v75 = vmul.f32 %v73, %v73
    %v76 = vmul.f32 %v74, %v74
    %v77 = vld [vmem:[#allocation2] sm:$0xff]
    %v78 = vadd.f32 %v75, %v76
    %v79 = vadd.f32 %v77, %v78
    %80 = vst [vmem:[#allocation2] sm:$0xff] %v79
    // Predicated region
    $region22: #{tpu_custom_call.1} parent=1 // pred_check
      %p81 = pneg %p64
    $region23: #{tpu_custom_call.1} parent=1 // pred_check_branch
      %83 = sbr.rel (%p81) target = $region25
    $region24: #{tpu_custom_call.1} parent=1 // pred_region
      %v84 = vld [vmem:[#allocation2] sm:$0xff]
      %85 = vst [vmem:[#allocation8] sm:$0xff] %v84
    $region25: #{tpu_custom_call.1} parent=1 // pred_fallthru
      _
    // Predicated region
    $region26: #{tpu_custom_call.1} parent=1 // pred_check
      _
    $region27: #{tpu_custom_call.1} parent=1 // pred_check_branch
      %87 = sbr.rel (0) target = $region29
    $region28: #{tpu_custom_call.1} parent=1 // pred_region
      %89 = vsyncadd [#allocation5], 0
      %s91 = sshll.u32 [#allocation8], 4
      %s92 = int_to_ptr.vmem [resolvable:$true] %s91
      %s93 = sshll.u32 %s2, 4
      %s94 = int_to_ptr.hbm [resolvable:$true] %s93
      %96 = dma.vmem_to_hbm [thread:$0]  %s92, 128, %s94, [#allocation5]
    $region29: #{tpu_custom_call.1} parent=1 // pred_fallthru
      _
    // Predicated region
    $region30: #{tpu_custom_call.1} parent=1 // pred_check
      _
    $region31: #{tpu_custom_call.1} parent=1 // pred_check_branch
      %98 = sbr.rel (0) target = $region33
    $region32: #{tpu_custom_call.1} parent=1 // pred_region
      %100 = dma.done [#allocation5], 128
    $region33: #{tpu_custom_call.1} parent=1 // pred_fallthru
      _
    %101 = vsyncpa [#allocation4], 1
    %102 = vsyncpa [#allocation7], 1
    %103 = vsyncpa [#allocation5], 1

</llo_original>
